<compile_context>
chip_gen: v6e
topology: v6e:2x2x1
jax: 0.10.0
libtpu: 0.0.40
codegen_flags: <defaults>
</compile_context>

<pallas_src>
import functools
import math

import jax
import jax.numpy as jnp
from jax.experimental import pallas as pl
from jax.experimental.pallas import tpu as pltpu


_GOLDEN = 0x9E3779B9
_FMIX1 = 0x7FEB352D
_FMIX2 = 0x846CA68B


def _hash_u32(x):
    """32-bit avalanche finalizer (murmur3 fmix32 style). x: uint32 array."""
    x = x ^ (x >> jnp.uint32(16))
    x = x * jnp.uint32(_FMIX1)
    x = x ^ (x >> jnp.uint32(15))
    x = x * jnp.uint32(_FMIX2)
    x = x ^ (x >> jnp.uint32(16))
    return x


def _pe_kernel(seed_ref, x_ref, pe_ref, o_ref, *,
               dropout_p: float, seq_tile: int, batch: int, d_model: int):
    """seed_ref: SMEM int32[1] (scalar prefetch); x_ref: (TS,B,D); pe_ref: (TS,1,D)."""
    y = x_ref[...] + pe_ref[...]                       # broadcast over batch (VPU)

    if dropout_p > 0.0:
        ts, b, d = x_ref.shape
        # Global linear element index -> dropout mask is independent of the
        # tiling and decorrelated across grid steps.
        s0 = pl.program_id(0) * seq_tile
        s_i = jax.lax.broadcasted_iota(jnp.int32, (ts, b, d), 0)
        b_i = jax.lax.broadcasted_iota(jnp.int32, (ts, b, d), 1)
        d_i = jax.lax.broadcasted_iota(jnp.int32, (ts, b, d), 2)
        lin = ((s0 + s_i) * batch + b_i) * d_model + d_i
        lin_u = lin.astype(jnp.uint32)
        seed_u = seed_ref[0].astype(jnp.uint32)
        bits = _hash_u32(lin_u ^ (seed_u * jnp.uint32(_GOLDEN)))
        # Threshold directly on the raw integer bits: P(drop) = thresh / 2^32 ~= p.
        thresh = jnp.uint32(min(int(round(dropout_p * (1 << 32))), (1 << 32) - 1))
        keep = bits >= thresh
        scale = 1.0 / (1.0 - dropout_p)
        y = jnp.where(keep, y * scale, jnp.zeros_like(y))
        # TODO(synk): torch.nn.Dropout draws from torch's RNG stream; the mask
        # here comes from a counter-based hash PRNG, so masks are not bit-identical.

    o_ref[...] = y.astype(o_ref.dtype)


def make_positional_encoding(max_len: int, d_model: int) -> jax.Array:
    """Same `pe` buffer as the PyTorch __init__, shape (max_len, 1, d_model)."""
    position = jnp.arange(max_len, dtype=jnp.float32)[:, None]
    div_term = jnp.exp(
        jnp.arange(0, d_model, 2, dtype=jnp.float32) * (-math.log(10000.0) / d_model)
    )
    pe = jnp.zeros((max_len, d_model), dtype=jnp.float32)
    pe = pe.at[:, 0::2].set(jnp.sin(position * div_term))
    pe = pe.at[:, 1::2].set(jnp.cos(position * div_term))
    return pe[:, None, :]  # (max_len, 1, d_model) == torch pe.unsqueeze(0).transpose(0,1)


def _choose_seq_tile(s: int, b: int, d: int, itemsize: int,
                     target_bytes: int = 2 * 1024 * 1024) -> int:
    """Sequence-tile so one x tile is ~2 MiB: fits double-buffered (x, pe, out)
    well inside the scoped-VMEM defaults of v5e (16 MiB), v6e (32) and v7x (32)."""
    rows = max(1, target_bytes // max(1, b * d * itemsize))
    return int(min(s, rows))


def positional_encoder(x, pe, *, dropout_p: float = 0.1, training: bool = True,
                       seed: int = 0, seq_tile: int | None = None):
    """x: (S, B, D); returns (S, B, D) with PE added (+ inverted dropout if training)."""
    S, B, D = x.shape
    pe_s = pe[:S].astype(x.dtype)          # (S, 1, D), matches self.pe[:x.size(0), :]
    p = float(dropout_p) if training else 0.0

    if seq_tile is None:
        seq_tile = _choose_seq_tile(S, B, D, x.dtype.itemsize)
    seq_tile = int(min(seq_tile, S))
    grid = (pl.cdiv(S, seq_tile),)

    seed_arr = jnp.array([seed], dtype=jnp.int32)
    kernel = functools.partial(_pe_kernel, dropout_p=p, seq_tile=seq_tile,
                               batch=B, d_model=D)

    # NOTE: block last-two dims are (B, D); for production shapes keep D a
    # multiple of 128 (and B >= 8) for lane/sublane-dense, unmasked stores.
    grid_spec = pltpu.PrefetchScalarGridSpec(
        num_scalar_prefetch=1,
        grid=grid,
        in_specs=[
            pl.BlockSpec((seq_tile, B, D), lambda i, seed: (i, 0, 0)),
            pl.BlockSpec((seq_tile, 1, D), lambda i, seed: (i, 0, 0)),
        ],
        out_specs=pl.BlockSpec((seq_tile, B, D), lambda i, seed: (i, 0, 0)),
    )

    return pl.pallas_call(
        kernel,
        out_shape=jax.ShapeDtypeStruct((S, B, D), x.dtype),
        grid_spec=grid_spec,
        compiler_params=pltpu.CompilerParams(
            # Tiles are independent (mask keyed on global index) -> shard the
            # sequence axis across v7x's two TensorCores; harmless on v5e/v6e.
            dimension_semantics=("parallel",),
            vmem_limit_bytes=32 * 1024 * 1024,
        ),
    )(seed_arr, x, pe_s)


if __name__ == "__main__":
    SEQ, BATCH, D_MODEL, MAX_LEN = 8, 2, 32, 64

    key = jax.random.PRNGKey(0)
    x = jax.random.normal(key, (SEQ, BATCH, D_MODEL), dtype=jnp.float32)
    pe = make_positional_encoding(MAX_LEN, D_MODEL)

    # Eval-mode (dropout disabled): exact reference check, default tiling.
    out_eval = jax.block_until_ready(
        positional_encoder(x, pe, dropout_p=0.1, training=False))
    ref = x + pe[:SEQ]
    assert jnp.allclose(out_eval, ref, atol=1e-6), "PE add mismatch"

    # Training mode, tiled over the sequence axis (grid=2) to exercise pipelining.
    p = 0.1
    out_t = jax.block_until_ready(
        positional_encoder(x, pe, dropout_p=p, training=True, seed=123, seq_tile=4))
    assert out_t.shape == (SEQ, BATCH, D_MODEL)

    # Kept elements must equal ref / (1 - p); dropped elements are exactly 0.
    expected_kept = ref * (1.0 / (1.0 - p))
    kept = out_t != 0
    assert bool(jnp.all(jnp.where(kept, jnp.abs(out_t - expected_kept) < 1e-4, True))), \
        "dropout kept-value mismatch"
    frac_dropped = 1.0 - float(jnp.mean(kept.astype(jnp.float32)))
    assert 0.0 <= frac_dropped < 0.5, f"implausible drop fraction {frac_dropped}"

    # Hash PRNG is tiling-invariant: single whole-array tile gives the same mask.
    out_w = jax.block_until_ready(
        positional_encoder(x, pe, dropout_p=p, training=True, seed=123, seq_tile=SEQ))
    assert jnp.array_equal(out_t, out_w), "dropout mask depends on tiling"

    print("KERNEL_OK")
</pallas_src>

<mosaic_0001>
module attributes {stable_mosaic.version = 11 : i64} {
  func.func @_pe_kernel(%arg0: i32, %arg1: memref<1xi32, #tpu.memory_space<smem>>, %arg2: memref<8x2x32xf32, #tpu.memory_space<vmem>>, %arg3: memref<8x1x32xf32, #tpu.memory_space<vmem>>, %arg4: memref<8x2x32xf32, #tpu.memory_space<vmem>>) attributes {dimension_semantics = [#tpu.dimension_semantics<parallel>], iteration_bounds = array<i64: 1>, scalar_prefetch = 1 : i64, scratch_operands = 0 : i64, tpu.core_type = #tpu.core_type<tc>, window_params = [{transform_indices = @transform_0, window_bounds = array<i64: 8, 2, 32>}, {transform_indices = @transform_1, window_bounds = array<i64: 8, 1, 32>}, {transform_indices = @transform_2, window_bounds = array<i64: 8, 2, 32>}]} {
    %c0 = arith.constant 0 : index
    %c0_0 = arith.constant 0 : index
    %c0_1 = arith.constant 0 : index
    %0 = vector.load %arg2[%c0, %c0_0, %c0_1] : memref<8x2x32xf32, #tpu.memory_space<vmem>>, vector<8x2x32xf32>
    %c0_2 = arith.constant 0 : index
    %c0_3 = arith.constant 0 : index
    %c0_4 = arith.constant 0 : index
    %1 = vector.load %arg3[%c0_2, %c0_3, %c0_4] : memref<8x1x32xf32, #tpu.memory_space<vmem>>, vector<8x1x32xf32>
    %2 = vector.broadcast %1 : vector<8x1x32xf32> to vector<8x2x32xf32>
    %3 = arith.addf %0, %2 : vector<8x2x32xf32>
    %c0_5 = arith.constant 0 : index
    %c0_6 = arith.constant 0 : index
    %c0_7 = arith.constant 0 : index
    %4 = vector.load %arg4[%c0_5, %c0_6, %c0_7] : memref<8x2x32xf32, #tpu.memory_space<vmem>>, vector<8x2x32xf32>
    tpu.vector_store %arg4[%c0_5, %c0_6, %c0_7], %3 {strides = array<i32>} : memref<8x2x32xf32, #tpu.memory_space<vmem>>, vector<8x2x32xf32>,
    return
  }
  func.func @transform_0(%arg0: i32, %arg1: memref<1xi32, #tpu.memory_space<smem>>) -> (i32, i32, i32) {
    %c0_i32 = arith.constant 0 : i32
    %c0_i32_0 = arith.constant 0 : i32
    %c0_i32_1 = arith.constant 0 : i32
    return %arg0, %c0_i32, %c0_i32_0 : i32, i32, i32
  }
  func.func @transform_1(%arg0: i32, %arg1: memref<1xi32, #tpu.memory_space<smem>>) -> (i32, i32, i32) {
    %c0_i32 = arith.constant 0 : i32
    %c0_i32_0 = arith.constant 0 : i32
    %c0_i32_1 = arith.constant 0 : i32
    return %arg0, %c0_i32, %c0_i32_0 : i32, i32, i32
  }
  func.func @transform_2(%arg0: i32, %arg1: memref<1xi32, #tpu.memory_space<smem>>) -> (i32, i32, i32) {
    %c0_i32 = arith.constant 0 : i32
    %c0_i32_0 = arith.constant 0 : i32
    %c0_i32_1 = arith.constant 0 : i32
    return %arg0, %c0_i32, %c0_i32_0 : i32, i32, i32
  }
}

</mosaic_0001>

<llo_original>
// kernel: tpu_custom_call.1
$region0: #{tpu_custom_call.1}
  #allocation0 [shape = 'u32[]', space=smem, size = 0x4, offset = 0x4, fixed_abs, tag = 'smem constant byte address 0x4 - core index']
  #allocation1 [shape = 'u32[144,128]{1,0:T(1,128)}', space=vmem, size = 0x12000, scoped, tag = 'internal scratch']
  #allocation2 [shape = 's32[1]{0}', space=sflag, size = 0x4, scoped, tag = 'scoped memory for tpu_custom_call.1']
  #allocation3 [shape = 's32[1]{0:T(128)S(6)}', space=smem, size = 0x200, scoped, tag = 'prefetched SMEM operand 0']
  %s0 = inlined_call_operand.<no memory space> [shape: s32[1], index: 0, kind: input, shape index: {}]
  %s1 = inlined_call_operand.hbm [shape: f32[8,2,32], index: 1, kind: input, shape index: {}]
  %s2 = inlined_call_operand.hbm [shape: f32[8,1,32], index: 2, kind: input, shape index: {}]
  %s3 = inlined_call_operand.hbm [shape: f32[8,2,32], index: 3, kind: output, shape index: {}]
  %s4 = sld [smem:[#allocation0]]
  $region26: #{tpu_custom_call.1} parent=0
    _
  %s6 = ssub.s32 1, %s4
  %s7 = scalar_select 0, %s6, %s4
  %8 = sst [smem:[#allocation3]] %s0
  $region1: #{tpu_custom_call.1} parent=0
    #allocation4 [shape = 'u8[8192]{0}', space=vmem, size = 0x2000, scoped, tag = 'input window, operand 1, single buffered']
    #allocation5 [shape = 's32[1]{0}', space=sflag, size = 0x4, scoped, tag = 'scoped memory for tpu_custom_call.1']
    #allocation6 [shape = 's32[1]{0}', space=sflag, size = 0x4, scoped, tag = 'scoped memory for tpu_custom_call.1']
    #allocation7 [shape = 'u8[4096]{0}', space=vmem, size = 0x1000, scoped, tag = 'input window, operand 2, single buffered']
    #allocation8 [shape = 's32[1]{0}', space=sflag, size = 0x4, scoped, tag = 'scoped memory for tpu_custom_call.1']
    #allocation9 [shape = 'u8[8192]{0}', space=vmem, size = 0x2000, scoped, tag = 'output window, operand 0, single buffered']
    %9 = vsyncpa [#allocation5], 0
    %10 = vsyncpa [#allocation8], 0
    %11 = vsyncpa [#allocation6], 0
    // Predicated region
    $region2: #{tpu_custom_call.1} parent=1 // pred_check
      _
    $region3: #{tpu_custom_call.1} parent=1 // pred_check_branch
      %13 = sbr.rel (0) target = $region5
    $region4: #{tpu_custom_call.1} parent=1 // pred_region
      %s15 = ssub.s32 256, 256
      %16 = vsyncadd [#allocation5], %s15
      %s17 = sshll.u32 [#allocation4], 4
      %s18 = int_to_ptr.vmem [resolvable:$true] %s17
      %23 = dma.hbm_to_vmem [thread:$0]  %s1, 256, %s18, [#allocation5], 32, 32, 2
    $region5: #{tpu_custom_call.1} parent=1 // pred_fallthru
      _
    // Predicated region
    $region6: #{tpu_custom_call.1} parent=1 // pred_check
      _
    $region7: #{tpu_custom_call.1} parent=1 // pred_check_branch
      %25 = sbr.rel (0) target = $region9
    $region8: #{tpu_custom_call.1} parent=1 // pred_region
      %s27 = ssub.s32 128, 128
      %28 = vsyncadd [#allocation8], %s27
      %s29 = sshll.u32 [#allocation7], 4
      %s30 = int_to_ptr.vmem [resolvable:$true] %s29
      %35 = dma.hbm_to_vmem [thread:$0]  %s2, 128, %s30, [#allocation8], 16, 16, 1
    $region9: #{tpu_custom_call.1} parent=1 // pred_fallthru
      _
    // Predicated region
    $region10: #{tpu_custom_call.1} parent=1 // pred_check
      _
    $region11: #{tpu_custom_call.1} parent=1 // pred_check_branch
      %37 = sbr.rel (0) target = $region13
    $region12: #{tpu_custom_call.1} parent=1 // pred_region
      %38 = dma.done [#allocation5], 256
    $region13: #{tpu_custom_call.1} parent=1 // pred_fallthru
      _
    // Predicated region
    $region14: #{tpu_custom_call.1} parent=1 // pred_check
      _
    $region15: #{tpu_custom_call.1} parent=1 // pred_check_branch
      %40 = sbr.rel (0) target = $region17
    $region16: #{tpu_custom_call.1} parent=1 // pred_region
      %41 = dma.done [#allocation8], 128
    $region17: #{tpu_custom_call.1} parent=1 // pred_fallthru
      _
    %v42 = vld [vmem:[#allocation4] sm:$0x3]
    %v43 = vld [vmem:[#allocation4 + $0x2] sm:$0x3]
    %v44 = vld [vmem:[#allocation4 + $0x4] sm:$0x3]
    %v45 = vld [vmem:[#allocation4 + $0x6] sm:$0x3]
    %v46 = vld [vmem:[#allocation4 + $0x8] sm:$0x3]
    %v47 = vld [vmem:[#allocation4 + $0xa] sm:$0x3]
    %v48 = vld [vmem:[#allocation4 + $0xc] sm:$0x3]
    %v49 = vld [vmem:[#allocation4 + $0xe] sm:$0x3]
    %v50 = vld [vmem:[#allocation7] sm:$0x1]
    %v51 = vld [vmem:[#allocation7 + $0x1] sm:$0x1]
    %v52 = vld [vmem:[#allocation7 + $0x2] sm:$0x1]
    %v53 = vld [vmem:[#allocation7 + $0x3] sm:$0x1]
    %v54 = vld [vmem:[#allocation7 + $0x4] sm:$0x1]
    %v55 = vld [vmem:[#allocation7 + $0x5] sm:$0x1]
    %v56 = vld [vmem:[#allocation7 + $0x6] sm:$0x1]
    %v57 = vld [vmem:[#allocation7 + $0x7] sm:$0x1]
    %v66 = vlaneseq
    %v67 = vshrl.u32 %v66, 7
    %v68 = vsub.s32 0, %v67
    %v69 = vrot.slane %v50, %v68
    %v70 = vlaneseq
    %v71 = vshrl.u32 %v70, 7
    %v72 = vsub.s32 0, %v71
    %v73 = vrot.slane %v51, %v72
    %v74 = vlaneseq
    %v75 = vshrl.u32 %v74, 7
    %v76 = vsub.s32 0, %v75
    %v77 = vrot.slane %v52, %v76
    %v78 = vlaneseq
    %v79 = vshrl.u32 %v78, 7
    %v80 = vsub.s32 0, %v79
    %v81 = vrot.slane %v53, %v80
    %v82 = vlaneseq
    %v83 = vshrl.u32 %v82, 7
    %v84 = vsub.s32 0, %v83
    %v85 = vrot.slane %v54, %v84
    %v86 = vlaneseq
    %v87 = vshrl.u32 %v86, 7
    %v88 = vsub.s32 0, %v87
    %v89 = vrot.slane %v55, %v88
    %v90 = vlaneseq
    %v91 = vshrl.u32 %v90, 7
    %v92 = vsub.s32 0, %v91
    %v93 = vrot.slane %v56, %v92
    %v94 = vlaneseq
    %v95 = vshrl.u32 %v94, 7
    %v96 = vsub.s32 0, %v95
    %v97 = vrot.slane %v57, %v96
    %v106 = vadd.f32 %v42, %v69
    %v107 = vadd.f32 %v43, %v73
    %v108 = vadd.f32 %v44, %v77
    %v109 = vadd.f32 %v45, %v81
    %v110 = vadd.f32 %v46, %v85
    %v111 = vadd.f32 %v47, %v89
    %v112 = vadd.f32 %v48, %v93
    %v113 = vadd.f32 %v49, %v97
    %vm114 = vcmask 254976
    %115 = vst.msk [vmem:[#allocation9] sm:$0x3] %vm114, %v106
    %116 = vst.msk [vmem:[#allocation9 + $0x2] sm:$0x3] %vm114, %v107
    %117 = vst.msk [vmem:[#allocation9 + $0x4] sm:$0x3] %vm114, %v108
    %118 = vst.msk [vmem:[#allocation9 + $0x6] sm:$0x3] %vm114, %v109
    %119 = vst.msk [vmem:[#allocation9 + $0x8] sm:$0x3] %vm114, %v110
    %120 = vst.msk [vmem:[#allocation9 + $0xa] sm:$0x3] %vm114, %v111
    %121 = vst.msk [vmem:[#allocation9 + $0xc] sm:$0x3] %vm114, %v112
    %122 = vst.msk [vmem:[#allocation9 + $0xe] sm:$0x3] %vm114, %v113
    // Predicated region
    $region18: #{tpu_custom_call.1} parent=1 // pred_check
      _
    $region19: #{tpu_custom_call.1} parent=1 // pred_check_branch
      %124 = sbr.rel (0) target = $region21
    $region20: #{tpu_custom_call.1} parent=1 // pred_region
      %s126 = ssub.s32 256, 256
      %127 = vsyncadd [#allocation6], %s126
      %s128 = sshll.u32 [#allocation9], 4
      %s129 = int_to_ptr.vmem [resolvable:$true] %s128
      %134 = dma.vmem_to_hbm [thread:$0]  %s129, 256, %s3, [#allocation6], 32, 32, 2
    $region21: #{tpu_custom_call.1} parent=1 // pred_fallthru
      _
    // Predicated region
    $region22: #{tpu_custom_call.1} parent=1 // pred_check
      _
    $region23: #{tpu_custom_call.1} parent=1 // pred_check_branch
      %136 = sbr.rel (0) target = $region25
    $region24: #{tpu_custom_call.1} parent=1 // pred_region
      %137 = dma.done [#allocation6], 256
    $region25: #{tpu_custom_call.1} parent=1 // pred_fallthru
      _
    %138 = vsyncpa [#allocation5], 1
    %139 = vsyncpa [#allocation8], 1
    %140 = vsyncpa [#allocation6], 1

</llo_original>
